<compile_context>
chip_gen: v6e
topology: v6e:2x2x1
jax: 0.10.0
libtpu: 0.0.40
codegen_flags: <defaults>
</compile_context>

<pallas_src>
import jax
import jax.numpy as jnp
from jax.experimental import pallas as pl
from jax.experimental.pallas import tpu as pltpu


def _smooth_l1_kernel(x_ref, t_ref, cls_ref, sum_ref, cnt_ref,
                      acc_ref, cnt_acc_ref):
    ti = pl.program_id(1)

    # New batch row: reset the resident accumulators.
    @pl.when(ti == 0)
    def _():
        acc_ref[...] = jnp.zeros_like(acc_ref)
        cnt_acc_ref[...] = jnp.zeros_like(cnt_acc_ref)

    x = x_ref[0].astype(jnp.float32)          # (C, TILE_HW)
    t = t_ref[0].astype(jnp.float32)          # (C, TILE_HW)
    d = jnp.abs(x - t)
    sl1 = jnp.where(d < 1.0, 0.5 * d * d, d - 0.5)   # smooth L1, beta = 1.0

    pos = cls_ref[0] > 0                      # (1, TILE_HW) bool, broadcasts over C
    acc_ref[...] += jnp.where(pos, sl1, 0.0)          # pure VPU adds in the hot loop
    cnt_acc_ref[...] += pos.astype(jnp.float32)

    # Last HW tile of this batch row: single sublane reduce -> lane-dense output.
    @pl.when(ti == pl.num_programs(1) - 1)
    def _():
        sum_ref[0] = jnp.sum(acc_ref[...], axis=0, keepdims=True)   # (1, TILE_HW)
        cnt_ref[0] = cnt_acc_ref[...]                               # (1, TILE_HW)


def _round_up(x, m):
    return ((x + m - 1) // m) * m


def smooth_l1_loss(inp, target, cls_target, *, tile_hw=None,
                   vmem_budget_bytes=8 * 1024 * 1024):
    """inp, target: (N, C, H, W); cls_target: (N, H, W). Returns f32 scalar."""
    N, C, H, W = inp.shape
    HW = H * W
    LANE = 128

    if tile_hw is None:
        # double-buffered working set ~ (2 inputs * 2 bufs * C + cls + scratch)
        # * TILE_HW * 4 B  ->  keep it under vmem_budget_bytes.
        cap = vmem_budget_bytes // (4 * (5 * C + 2))
        tile_hw = max(LANE, min(8192, (cap // LANE) * LANE))
    tile_hw = min(tile_hw, _round_up(HW, LANE))
    hw_pad = _round_up(HW, tile_hw)
    num_tiles = hw_pad // tile_hw

    # Keep original dtype (bf16 stays bf16 -> half the HBM read traffic).
    x = inp.reshape(N, C, HW)
    t = target.reshape(N, C, HW)
    cls = cls_target.reshape(N, 1, HW)
    if hw_pad != HW:
        pad = hw_pad - HW
        x = jnp.pad(x, ((0, 0), (0, 0), (0, pad)))
        t = jnp.pad(t, ((0, 0), (0, 0), (0, pad)))
        cls = jnp.pad(cls, ((0, 0), (0, 0), (0, pad)))   # pad = 0 -> masked out

    sums, cnts = pl.pallas_call(
        _smooth_l1_kernel,
        out_shape=(jax.ShapeDtypeStruct((N, 1, tile_hw), jnp.float32),
                   jax.ShapeDtypeStruct((N, 1, tile_hw), jnp.float32)),
        grid_spec=pltpu.PrefetchScalarGridSpec(
            num_scalar_prefetch=0,
            grid=(N, num_tiles),
            in_specs=[
                pl.BlockSpec((1, C, tile_hw), lambda b, ti: (b, 0, ti)),
                pl.BlockSpec((1, C, tile_hw), lambda b, ti: (b, 0, ti)),
                pl.BlockSpec((1, 1, tile_hw), lambda b, ti: (b, 0, ti)),
            ],
            out_specs=(
                pl.BlockSpec((1, 1, tile_hw), lambda b, ti: (b, 0, 0)),
                pl.BlockSpec((1, 1, tile_hw), lambda b, ti: (b, 0, 0)),
            ),
            scratch_shapes=[
                pltpu.VMEM((C, tile_hw), jnp.float32),   # running masked sl1
                pltpu.VMEM((1, tile_hw), jnp.float32),   # running positive count
            ],
        ),
        compiler_params=pltpu.CompilerParams(
            dimension_semantics=("parallel", "arbitrary")),
    )(x, t, cls)

    total = jnp.sum(sums)
    num_pixels = jnp.sum(cnts)
    denom = jnp.maximum(num_pixels * jnp.float32(C), 1.0)
    return jnp.where(num_pixels > 0, total / denom, jnp.float32(0.0))


def _reference(inp, target, cls_target):
    mask = (cls_target > 0).astype(jnp.float32)              # (N, H, W)
    num_pixels = jnp.sum(mask)
    m = mask[:, None, :, :]                                   # broadcast over C
    d = jnp.abs(inp.astype(jnp.float32) - target.astype(jnp.float32))
    sl1 = jnp.where(d < 1.0, 0.5 * d * d, d - 0.5)
    total = jnp.sum(sl1 * m)
    denom = num_pixels * inp.shape[1]
    return jnp.where(num_pixels > 0, total / jnp.maximum(denom, 1.0), 0.0)


if __name__ == "__main__":
    key = jax.random.PRNGKey(0)

    # Case 1: small, HW exactly lane-tiled.
    k1, k2, k3 = jax.random.split(key, 3)
    N, C, H, W = 2, 4, 16, 16
    inp = jax.random.normal(k1, (N, C, H, W), dtype=jnp.float32)
    target = jax.random.normal(k2, (N, C, H, W), dtype=jnp.float32)
    cls_target = jax.random.randint(k3, (N, H, W), minval=0, maxval=3,
                                    dtype=jnp.int32)
    loss = smooth_l1_loss(inp, target, cls_target)
    jax.block_until_ready(loss)
    ref = _reference(inp, target, cls_target)
    assert jnp.allclose(loss, ref, atol=1e-5, rtol=1e-5), (loss, ref)

    # Case 2: odd spatial size -> exercises the HW padding path.
    k4, k5, k6 = jax.random.split(jax.random.PRNGKey(1), 3)
    N2, C2, H2, W2 = 2, 4, 17, 19
    inp2 = jax.random.normal(k4, (N2, C2, H2, W2), dtype=jnp.float32)
    target2 = jax.random.normal(k5, (N2, C2, H2, W2), dtype=jnp.float32)
    cls2 = jax.random.randint(k6, (N2, H2, W2), minval=0, maxval=2,
                              dtype=jnp.int32)
    loss2 = smooth_l1_loss(inp2, target2, cls2)
    jax.block_until_ready(loss2)
    ref2 = _reference(inp2, target2, cls2)
    assert jnp.allclose(loss2, ref2, atol=1e-5, rtol=1e-5), (loss2, ref2)

    print("KERNEL_OK")
</pallas_src>

<mosaic_0001>
module attributes {stable_mosaic.version = 11 : i64} {
  func.func @_smooth_l1_kernel(%arg0: i32, %arg1: i32, %arg2: memref<1x4x256xf32, #tpu.memory_space<vmem>>, %arg3: memref<1x4x256xf32, #tpu.memory_space<vmem>>, %arg4: memref<1x1x256xi32, #tpu.memory_space<vmem>>, %arg5: memref<1x1x256xf32, #tpu.memory_space<vmem>>, %arg6: memref<1x1x256xf32, #tpu.memory_space<vmem>>, %arg7: memref<4x256xf32, #tpu.memory_space<vmem>>, %arg8: memref<1x256xf32, #tpu.memory_space<vmem>>) attributes {dimension_semantics = [#tpu.dimension_semantics<parallel>, #tpu.dimension_semantics<arbitrary>], iteration_bounds = array<i64: 2, 1>, scalar_prefetch = 0 : i64, scratch_operands = 2 : i64, tpu.core_type = #tpu.core_type<tc>, window_params = [{transform_indices = @transform_0, window_bounds = array<i64: 1, 4, 256>}, {transform_indices = @transform_1, window_bounds = array<i64: 1, 4, 256>}, {transform_indices = @transform_2, window_bounds = array<i64: 1, 1, 256>}, {transform_indices = @transform_3, window_bounds = array<i64: 1, 1, 256>}, {transform_indices = @transform_4, window_bounds = array<i64: 1, 1, 256>}]} {
    %c0_i32 = arith.constant 0 : i32
    %0 = arith.cmpi eq, %arg1, %c0_i32 : i32
    %1 = arith.extui %0 : i1 to i32
    %c0_i32_0 = arith.constant 0 : i32
    %2 = arith.cmpi ne, %1, %c0_i32_0 : i32
    scf.if %2 {
      %cst_23 = arith.constant 0.000000e+00 : f32
      %36 = vector.broadcast %cst_23 : f32 to vector<4x256xf32>
      %c0_24 = arith.constant 0 : index
      %c0_25 = arith.constant 0 : index
      %37 = vector.load %arg7[%c0_24, %c0_25] : memref<4x256xf32, #tpu.memory_space<vmem>>, vector<4x256xf32>
      tpu.vector_store %arg7[%c0_24, %c0_25], %36 {strides = array<i32>} : memref<4x256xf32, #tpu.memory_space<vmem>>, vector<4x256xf32>,
      %cst_26 = arith.constant 0.000000e+00 : f32
      %38 = vector.broadcast %cst_26 : f32 to vector<1x256xf32>
      %c0_27 = arith.constant 0 : index
      %c0_28 = arith.constant 0 : index
      %39 = vector.load %arg8[%c0_27, %c0_28] : memref<1x256xf32, #tpu.memory_space<vmem>>, vector<1x256xf32>
      tpu.vector_store %arg8[%c0_27, %c0_28], %38 {strides = array<i32>} : memref<1x256xf32, #tpu.memory_space<vmem>>, vector<1x256xf32>,
    } else {
    }
    %c0 = arith.constant 0 : index
    %c0_1 = arith.constant 0 : index
    %c0_2 = arith.constant 0 : index
    %3 = vector.load %arg2[%c0, %c0_1, %c0_2] : memref<1x4x256xf32, #tpu.memory_space<vmem>>, vector<1x4x256xf32>
    %4 = vector.shape_cast %3 : vector<1x4x256xf32> to vector<4x256xf32>
    %c0_3 = arith.constant 0 : index
    %c0_4 = arith.constant 0 : index
    %c0_5 = arith.constant 0 : index
    %5 = vector.load %arg3[%c0_3, %c0_4, %c0_5] : memref<1x4x256xf32, #tpu.memory_space<vmem>>, vector<1x4x256xf32>
    %6 = vector.shape_cast %5 : vector<1x4x256xf32> to vector<4x256xf32>
    %7 = arith.subf %4, %6 : vector<4x256xf32>
    %8 = math.absf %7 : vector<4x256xf32>
    %cst = arith.constant 1.000000e+00 : f32
    %9 = vector.broadcast %cst : f32 to vector<4x256xf32>
    %10 = arith.cmpf olt, %8, %9 : vector<4x256xf32>
    %cst_6 = arith.constant 5.000000e-01 : f32
    %11 = vector.broadcast %cst_6 : f32 to vector<4x256xf32>
    %12 = arith.mulf %11, %8 : vector<4x256xf32>
    %13 = arith.mulf %12, %8 : vector<4x256xf32>
    %cst_7 = arith.constant 5.000000e-01 : f32
    %14 = vector.broadcast %cst_7 : f32 to vector<4x256xf32>
    %15 = arith.subf %8, %14 : vector<4x256xf32>
    %16 = arith.select %10, %13, %15 : vector<4x256xi1>, vector<4x256xf32>
    %c0_8 = arith.constant 0 : index
    %c0_9 = arith.constant 0 : index
    %c0_10 = arith.constant 0 : index
    %17 = vector.load %arg4[%c0_8, %c0_9, %c0_10] : memref<1x1x256xi32, #tpu.memory_space<vmem>>, vector<1x1x256xi32>
    %18 = vector.shape_cast %17 : vector<1x1x256xi32> to vector<1x256xi32>
    %c0_i32_11 = arith.constant 0 : i32
    %19 = vector.broadcast %c0_i32_11 : i32 to vector<1x256xi32>
    %20 = arith.cmpi sgt, %18, %19 : vector<1x256xi32>
    %c0_12 = arith.constant 0 : index
    %c0_13 = arith.constant 0 : index
    %21 = vector.load %arg7[%c0_12, %c0_13] : memref<4x256xf32, #tpu.memory_space<vmem>>, vector<4x256xf32>
    %cst_14 = arith.constant 0.000000e+00 : f32
    %22 = vector.shape_cast %20 : vector<1x256xi1> to vector<1x256xi1>
    %23 = vector.broadcast %22 : vector<1x256xi1> to vector<4x256xi1>
    %24 = vector.broadcast %cst_14 : f32 to vector<4x256xf32>
    %25 = arith.select %23, %16, %24 : vector<4x256xi1>, vector<4x256xf32>
    %26 = arith.addf %21, %25 : vector<4x256xf32>
    %c0_15 = arith.constant 0 : index
    %c0_16 = arith.constant 0 : index
    %27 = vector.load %arg7[%c0_15, %c0_16] : memref<4x256xf32, #tpu.memory_space<vmem>>, vector<4x256xf32>
    tpu.vector_store %arg7[%c0_15, %c0_16], %26 {strides = array<i32>} : memref<4x256xf32, #tpu.memory_space<vmem>>, vector<4x256xf32>,
    %c0_17 = arith.constant 0 : index
    %c0_18 = arith.constant 0 : index
    %28 = vector.load %arg8[%c0_17, %c0_18] : memref<1x256xf32, #tpu.memory_space<vmem>>, vector<1x256xf32>
    %29 = arith.extui %20 : vector<1x256xi1> to vector<1x256xi32>
    %30 = arith.sitofp %29 : vector<1x256xi32> to vector<1x256xf32>
    %31 = arith.addf %28, %30 : vector<1x256xf32>
    %c0_19 = arith.constant 0 : index
    %c0_20 = arith.constant 0 : index
    %32 = vector.load %arg8[%c0_19, %c0_20] : memref<1x256xf32, #tpu.memory_space<vmem>>, vector<1x256xf32>
    tpu.vector_store %arg8[%c0_19, %c0_20], %31 {strides = array<i32>} : memref<1x256xf32, #tpu.memory_space<vmem>>, vector<1x256xf32>,
    %c0_i32_21 = arith.constant 0 : i32
    %33 = arith.cmpi eq, %arg1, %c0_i32_21 : i32
    %34 = arith.extui %33 : i1 to i32
    %c0_i32_22 = arith.constant 0 : i32
    %35 = arith.cmpi ne, %34, %c0_i32_22 : i32
    scf.if %35 {
      %c0_23 = arith.constant 0 : index
      %c0_24 = arith.constant 0 : index
      %36 = vector.load %arg7[%c0_23, %c0_24] : memref<4x256xf32, #tpu.memory_space<vmem>>, vector<4x256xf32>
      %cst_25 = arith.constant dense<0.000000e+00> : vector<256xf32>
      %37 = vector.multi_reduction <add>, %36, %cst_25 [0] : vector<4x256xf32> to vector<256xf32>
      %38 = vector.shape_cast %37 : vector<256xf32> to vector<1x256xf32>
      %c0_26 = arith.constant 0 : index
      %c0_27 = arith.constant 0 : index
      %c0_28 = arith.constant 0 : index
      %39 = vector.load %arg5[%c0_26, %c0_27, %c0_28] : memref<1x1x256xf32, #tpu.memory_space<vmem>>, vector<1x1x256xf32>
      %40 = vector.shape_cast %39 : vector<1x1x256xf32> to vector<1x256xf32>
      %41 = vector.shape_cast %38 : vector<1x256xf32> to vector<1x1x256xf32>
      tpu.vector_store %arg5[%c0_26, %c0_27, %c0_28], %41 {strides = array<i32>} : memref<1x1x256xf32, #tpu.memory_space<vmem>>, vector<1x1x256xf32>,
      %c0_29 = arith.constant 0 : index
      %c0_30 = arith.constant 0 : index
      %42 = vector.load %arg8[%c0_29, %c0_30] : memref<1x256xf32, #tpu.memory_space<vmem>>, vector<1x256xf32>
      %c0_31 = arith.constant 0 : index
      %c0_32 = arith.constant 0 : index
      %c0_33 = arith.constant 0 : index
      %43 = vector.load %arg6[%c0_31, %c0_32, %c0_33] : memref<1x1x256xf32, #tpu.memory_space<vmem>>, vector<1x1x256xf32>
      %44 = vector.shape_cast %43 : vector<1x1x256xf32> to vector<1x256xf32>
      %45 = vector.shape_cast %42 : vector<1x256xf32> to vector<1x1x256xf32>
      tpu.vector_store %arg6[%c0_31, %c0_32, %c0_33], %45 {strides = array<i32>} : memref<1x1x256xf32, #tpu.memory_space<vmem>>, vector<1x1x256xf32>,
    } else {
    }
    return
  }
  func.func @transform_0(%arg0: i32, %arg1: i32) -> (i32, i32, i32) {
    %c0_i32 = arith.constant 0 : i32
    %c0_i32_0 = arith.constant 0 : i32
    return %arg0, %c0_i32, %arg1 : i32, i32, i32
  }
  func.func @transform_1(%arg0: i32, %arg1: i32) -> (i32, i32, i32) {
    %c0_i32 = arith.constant 0 : i32
    %c0_i32_0 = arith.constant 0 : i32
    return %arg0, %c0_i32, %arg1 : i32, i32, i32
  }
  func.func @transform_2(%arg0: i32, %arg1: i32) -> (i32, i32, i32) {
    %c0_i32 = arith.constant 0 : i32
    %c0_i32_0 = arith.constant 0 : i32
    return %arg0, %c0_i32, %arg1 : i32, i32, i32
  }
  func.func @transform_3(%arg0: i32, %arg1: i32) -> (i32, i32, i32) {
    %c0_i32 = arith.constant 0 : i32
    %c0_i32_0 = arith.constant 0 : i32
    %c0_i32_1 = arith.constant 0 : i32
    return %arg0, %c0_i32, %c0_i32_0 : i32, i32, i32
  }
  func.func @transform_4(%arg0: i32, %arg1: i32) -> (i32, i32, i32) {
    %c0_i32 = arith.constant 0 : i32
    %c0_i32_0 = arith.constant 0 : i32
    %c0_i32_1 = arith.constant 0 : i32
    return %arg0, %c0_i32, %c0_i32_0 : i32, i32, i32
  }
}

</mosaic_0001>

<llo_original>
// kernel: tpu_custom_call.1
$region0: #{tpu_custom_call.1}
  #allocation0 [shape = 'u32[]', space=smem, size = 0x4, offset = 0x4, fixed_abs, tag = 'smem constant byte address 0x4 - core index']
  #allocation1 [shape = 'u32[144,128]{1,0:T(1,128)}', space=vmem, size = 0x12000, scoped, tag = 'internal scratch']
  #allocation2 [shape = 'f32[4,256]{1,0:T(4,128)}', space=vmem, size = 0x1000, scoped, tag = 'scratch operand']
  #allocation3 [shape = 'f32[1,256]{1,0:T(1,128)}', space=vmem, size = 0x400, scoped, tag = 'scratch operand']
  %s0 = inlined_call_operand.hbm [shape: f32[2,4,256], index: 0, kind: input, shape index: {}]
  %s1 = inlined_call_operand.hbm [shape: f32[2,4,256], index: 1, kind: input, shape index: {}]
  %s2 = inlined_call_operand.hbm [shape: s32[2,1,256], index: 2, kind: input, shape index: {}]
  %s3 = inlined_call_operand.hbm [shape: f32[2,1,256], index: 3, kind: output, shape index: {0}]
  %s4 = inlined_call_operand.hbm [shape: f32[2,1,256], index: 4, kind: output, shape index: {1}]
  %5 = xla_tuple %s3, %s4
  %s6 = sld [smem:[#allocation0]]
  $region73: #{tpu_custom_call.1} parent=0
    _
  %s8 = ssub.s32 1, %s6
  %s9 = scalar_select 0, %s8, %s6
  $region1: #{tpu_custom_call.1} parent=0
    #allocation4 [shape = 'u8[8192]{0}', space=vmem, size = 0x2000, scoped, tag = 'input window, operand 0']
    #allocation5 [shape = 's32[2]{0}', space=sflag, size = 0x8, scoped, tag = 'scoped memory for tpu_custom_call.1']
    #allocation6 [shape = 's32[2]{0}', space=sflag, size = 0x8, scoped, tag = 'scoped memory for tpu_custom_call.1']
    #allocation7 [shape = 'u8[8192]{0}', space=vmem, size = 0x2000, scoped, tag = 'input window, operand 1']
    #allocation8 [shape = 's32[2]{0}', space=sflag, size = 0x8, scoped, tag = 'scoped memory for tpu_custom_call.1']
    #allocation9 [shape = 'u8[2048]{0}', space=vmem, size = 0x800, scoped, tag = 'input window, operand 2']
    #allocation10 [shape = 'u8[2048]{0}', space=vmem, size = 0x800, scoped, tag = 'output window, operand 0']
    #allocation11 [shape = 'u8[2048]{0}', space=vmem, size = 0x800, scoped, tag = 'output window, operand 1']
    #allocation12 [shape = 's32[2]{0}', space=sflag, size = 0x8, scoped, tag = 'scoped memory for tpu_custom_call.1']
    %10 = vsyncpa [#allocation5], 0
    %s11 = scalar_lea.sflag [#allocation5], 1
    %12 = vsyncpa %s11, 0
    %13 = vsyncpa [#allocation8], 0
    %s14 = scalar_lea.sflag [#allocation8], 1
    %15 = vsyncpa %s14, 0
    %16 = vsyncpa [#allocation6], 0
    %s17 = scalar_lea.sflag [#allocation6], 1
    %18 = vsyncpa %s17, 0
    %19 = vsyncpa [#allocation12], 0
    %s20 = scalar_lea.sflag [#allocation12], 1
    %21 = vsyncpa %s20, 0
    loop: start=0, step=1, limit=4
    $region2: #{tpu_custom_call.1} parent=1 // loop_pre_header
      _
    $region3: #{tpu_custom_call.1} parent=1 // loop_header
      %s23 = sphi 0, %s27
      %p24 = scmp.ge.s32.totalorder %s23, 4
      %s30 = sphi 0, %s42
      %s31 = sphi 0, %s38
      %s32 = sphi 0, %s30
      %s33 = sphi 0, %s31
      %s34 = sphi 0, %s32
      %s35 = sphi 0, %s33
      %s47 = sphi 0, %s49
      %s50 = sphi 0, %s47
      %s51 = sphi 0, %s50
      %s67 = sphi 0, %s51
      %s75 = sphi 0, %s77
      %s78 = sphi 0, %s75
      %s79 = sphi 0, %s78
      %s95 = sphi 0, %s79
      %s103 = sphi 0, %s105
      %s106 = sphi 0, %s103
      %s107 = sphi 0, %s106
      %s123 = sphi 0, %s107
      %s129 = sphi 0, %s131
      %s132 = sphi 0, %s129
      %s133 = sphi 0, %s132
      %s149 = sphi 0, %s133
      %s155 = sphi 0, %s157
      %s158 = sphi 0, %s155
      %s159 = sphi 0, %s158
      %s175 = sphi 0, %s159
    $region4: #{tpu_custom_call.1} parent=1 // loop_header_branch
      %26 = sbr.rel (%p24) target = $region8
    $region5: #{tpu_custom_call.1} parent=1 // loop_body
      %s28 = ssub.s32 %s23, 1
      %s29 = ssub.s32 %s23, 2
      %s36 = sadd.s32 1, %s31
      %p37 = scmp.ge.s32.totalorder %s36, 1
      %s38 = scalar_select %p37, 0, %s36
      %s39 = sadd.s32 1, %s30
      %s40 = scalar_select %p37, %s39, %s30
      %p41 = scmp.ge.s32.totalorder %s40, 2
      %s42 = scalar_select %p41, 0, %s40
      %s43 = ssub.s32 %s30, %s42
      %s44 = ssub.s32 %s31, %s38
      %s45 = sor.u32 %s43, %s44
      %p46 = scmp.eq.s32.totalorder %s45, 0
      %s48 = sadd.s32 %s47, 1
      %s49 = scalar_select %p46, %s47, %s48
      %p52 = pneg %p46
      %p53 = scmp.eq.s32.totalorder %s23, 1
      %p54 = por %p52, %p53
      %p55 = scmp.ne.s32.totalorder %s47, %s50
      %p56 = scmp.eq.s32.totalorder %s23, 0
      %p57 = por %p55, %p56
      %p58 = scmp.ne.s32.totalorder %s47, %s50
      %p59 = scmp.eq.s32.totalorder %s28, 1
      %p60 = por %p58, %p59
      %p61 = scmp.ne.s32.totalorder %s50, %s51
      %p62 = scmp.eq.s32.totalorder %s28, 0
      %p63 = por %p61, %p62
      %p64 = scmp.ne.s32.totalorder %s50, %s51
      %p65 = scmp.eq.s32.totalorder %s29, 1
      %p66 = por %p64, %p65
      %p68 = scmp.ne.s32.totalorder %s51, %s67
      %p69 = scmp.eq.s32.totalorder %s29, 0
      %p70 = por %p68, %p69
      %s71 = ssub.s32 %s30, %s42
      %s72 = ssub.s32 %s31, %s38
      %s73 = sor.u32 %s71, %s72
      %p74 = scmp.eq.s32.totalorder %s73, 0
      %s76 = sadd.s32 %s75, 1
      %s77 = scalar_select %p74, %s75, %s76
      %p80 = pneg %p74
      %p81 = scmp.eq.s32.totalorder %s23, 1
      %p82 = por %p80, %p81
      %p83 = scmp.ne.s32.totalorder %s75, %s78
      %p84 = scmp.eq.s32.totalorder %s23, 0
      %p85 = por %p83, %p84
      %p86 = scmp.ne.s32.totalorder %s75, %s78
      %p87 = scmp.eq.s32.totalorder %s28, 1
      %p88 = por %p86, %p87
      %p89 = scmp.ne.s32.totalorder %s78, %s79
      %p90 = scmp.eq.s32.totalorder %s28, 0
      %p91 = por %p89, %p90
      %p92 = scmp.ne.s32.totalorder %s78, %s79
      %p93 = scmp.eq.s32.totalorder %s29, 1
      %p94 = por %p92, %p93
      %p96 = scmp.ne.s32.totalorder %s79, %s95
      %p97 = scmp.eq.s32.totalorder %s29, 0
      %p98 = por %p96, %p97
      %s99 = ssub.s32 %s30, %s42
      %s100 = ssub.s32 %s31, %s38
      %s101 = sor.u32 %s99, %s100
      %p102 = scmp.eq.s32.totalorder %s101, 0
      %s104 = sadd.s32 %s103, 1
      %s105 = scalar_select %p102, %s103, %s104
      %p108 = pneg %p102
      %p109 = scmp.eq.s32.totalorder %s23, 1
      %p110 = por %p108, %p109
      %p111 = scmp.ne.s32.totalorder %s103, %s106
      %p112 = scmp.eq.s32.totalorder %s23, 0
      %p113 = por %p111, %p112
      %p114 = scmp.ne.s32.totalorder %s103, %s106
      %p115 = scmp.eq.s32.totalorder %s28, 1
      %p116 = por %p114, %p115
      %p117 = scmp.ne.s32.totalorder %s106, %s107
      %p118 = scmp.eq.s32.totalorder %s28, 0
      %p119 = por %p117, %p118
      %p120 = scmp.ne.s32.totalorder %s106, %s107
      %p121 = scmp.eq.s32.totalorder %s29, 1
      %p122 = por %p120, %p121
      %p124 = scmp.ne.s32.totalorder %s107, %s123
      %p125 = scmp.eq.s32.totalorder %s29, 0
      %p126 = por %p124, %p125
      %s127 = ssub.s32 %s30, %s42
      %p128 = scmp.eq.s32.totalorder %s127, 0
      %s130 = sadd.s32 %s129, 1
      %s131 = scalar_select %p128, %s129, %s130
      %p134 = pneg %p128
      %p135 = scmp.eq.s32.totalorder %s23, 1
      %p136 = por %p134, %p135
      %p137 = scmp.ne.s32.totalorder %s129, %s132
      %p138 = scmp.eq.s32.totalorder %s23, 0
      %p139 = por %p137, %p138
      %p140 = scmp.ne.s32.totalorder %s129, %s132
      %p141 = scmp.eq.s32.totalorder %s28, 1
      %p142 = por %p140, %p141
      %p143 = scmp.ne.s32.totalorder %s132, %s133
      %p144 = scmp.eq.s32.totalorder %s28, 0
      %p145 = por %p143, %p144
      %p146 = scmp.ne.s32.totalorder %s132, %s133
      %p147 = scmp.eq.s32.totalorder %s29, 1
      %p148 = por %p146, %p147
      %p150 = scmp.ne.s32.totalorder %s133, %s149
      %p151 = scmp.eq.s32.totalorder %s29, 0
      %p152 = por %p150, %p151
      %s153 = ssub.s32 %s30, %s42
      %p154 = scmp.eq.s32.totalorder %s153, 0
      %s156 = sadd.s32 %s155, 1
      %s157 = scalar_select %p154, %s155, %s156
      %p160 = pneg %p154
      %p161 = scmp.eq.s32.totalorder %s23, 1
      %p162 = por %p160, %p161
      %p163 = scmp.ne.s32.totalorder %s155, %s158
      %p164 = scmp.eq.s32.totalorder %s23, 0
      %p165 = por %p163, %p164
      %p166 = scmp.ne.s32.totalorder %s155, %s158
      %p167 = scmp.eq.s32.totalorder %s28, 1
      %p168 = por %p166, %p167
      %p169 = scmp.ne.s32.totalorder %s158, %s159
      %p170 = scmp.eq.s32.totalorder %s28, 0
      %p171 = por %p169, %p170
      %p172 = scmp.ne.s32.totalorder %s158, %s159
      %p173 = scmp.eq.s32.totalorder %s29, 1
      %p174 = por %p172, %p173
      %p176 = scmp.ne.s32.totalorder %s159, %s175
      %p177 = scmp.eq.s32.totalorder %s29, 0
      %p178 = por %p176, %p177
      %p179 = scmp.le.s32.totalorder 1, %s23
      %p180 = scmp.lt.s32.totalorder %s23, 3
      %p181 = pnand %p179, %p180
      %p182 = pneg %p181
      // Predicated region
      $region9: #{tpu_custom_call.1} parent=5 // pred_check
        _
      $region10: #{tpu_custom_call.1} parent=5 // pred_check_branch
        %184 = sbr.rel (%p181) target = $region12
      $region11: #{tpu_custom_call.1} parent=5 // pred_region
        %s185 = ssub.s32 %s23, 1
      $region12: #{tpu_custom_call.1} parent=5 // pred_fallthru
        _
      %p186 = scmp.lt.s32.totalorder %s23, 2
      // Predicated region
      $region13: #{tpu_custom_call.1} parent=5 // pred_check
        %p187 = pneg %p186
      $region14: #{tpu_custom_call.1} parent=5 // pred_check_branch
        %189 = sbr.rel (%p187) target = $region16
      $region15: #{tpu_custom_call.1} parent=5 // pred_region
        // Predicated region
        $region17: #{tpu_custom_call.1} parent=15 // pred_check
          %p190 = pneg %p57
        $region18: #{tpu_custom_call.1} parent=15 // pred_check_branch
          %192 = sbr.rel (%p190) target = $region20
        $region19: #{tpu_custom_call.1} parent=15 // pred_region
          %s193 = sand.u32 %s47, 1
          %s194 = scalar_lea.sflag [#allocation5], %s193
          %s195 = sand.u32 %s47, 1
          %s196 = smul.addr %s195, 8
          %s197 = scalar_lea.vmem [#allocation4], %s196
          %s198 = smul.u32 2, %s31
          %s200 = ssub.s32 128, 128
          %201 = vsyncadd %s194, %s200
          %s202 = smul.addr %s30, 2
          %s203 = sadd.s32 %s198, %s202
          %s204 = smul.addr %s203, 64
          %s205 = scalar_lea.hbm %s0, %s204
          %s207 = sshll.u32 %s197, 4
          %s208 = int_to_ptr.vmem [resolvable:$true] %s207
          %210 = dma.hbm_to_vmem [thread:$0]  %s205, 128, %s208, %s194
        $region20: #{tpu_custom_call.1} parent=15 // pred_fallthru
          _
        // Predicated region
        $region21: #{tpu_custom_call.1} parent=15 // pred_check
          %p211 = pneg %p85
        $region22: #{tpu_custom_call.1} parent=15 // pred_check_branch
          %213 = sbr.rel (%p211) target = $region24
        $region23: #{tpu_custom_call.1} parent=15 // pred_region
          %s214 = sand.u32 %s23, 1
          %s215 = scalar_lea.sflag [#allocation8], %s214
          %s216 = sand.u32 %s75, 1
          %s217 = smul.addr %s216, 8
          %s218 = scalar_lea.vmem [#allocation7], %s217
          %s219 = smul.u32 2, %s31
          %s221 = ssub.s32 128, 128
          %222 = vsyncadd %s215, %s221
          %s223 = smul.addr %s30, 2
          %s224 = sadd.s32 %s219, %s223
          %s225 = smul.addr %s224, 64
          %s226 = scalar_lea.hbm %s1, %s225
          %s228 = sshll.u32 %s218, 4
          %s229 = int_to_ptr.vmem [resolvable:$true] %s228
          %231 = dma.hbm_to_vmem [thread:$0]  %s226, 128, %s229, %s215
        $region24: #{tpu_custom_call.1} parent=15 // pred_fallthru
          _
        // Predicated region
        $region25: #{tpu_custom_call.1} parent=15 // pred_check
          %p232 = pneg %p113
        $region26: #{tpu_custom_call.1} parent=15 // pred_check_branch
          %234 = sbr.rel (%p232) target = $region28
        $region27: #{tpu_custom_call.1} parent=15 // pred_region
          %s235 = sand.u32 %s23, 1
          %s236 = scalar_lea.sflag [#allocation8], %s235
          %s237 = sand.u32 %s103, 1
          %s238 = smul.addr %s237, 2
          %s239 = scalar_lea.vmem [#allocation9], %s238
          %s240 = smul.u32 2, %s31
          %s242 = ssub.s32 32, 32
          %243 = vsyncadd %s236, %s242
          %s244 = smul.addr %s30, 2
          %s245 = sadd.s32 %s240, %s244
          %s246 = smul.addr %s245, 16
          %s247 = scalar_lea.hbm %s2, %s246
          %s249 = sshll.u32 %s239, 4
          %s250 = int_to_ptr.vmem [resolvable:$true] %s249
          %252 = dma.hbm_to_vmem [thread:$0]  %s247, 32, %s250, %s236
        $region28: #{tpu_custom_call.1} parent=15 // pred_fallthru
          _
      $region16: #{tpu_custom_call.1} parent=5 // pred_fallthru
        _
      %p253 = scmp.le.s32.totalorder 1, %s23
      %p254 = scmp.lt.s32.totalorder %s23, 3
      %p255 = pnand %p253, %p254
      %p256 = pneg %p255
      // Predicated region
      $region29: #{tpu_custom_call.1} parent=5 // pred_check
        _
      $region30: #{tpu_custom_call.1} parent=5 // pred_check_branch
        %258 = sbr.rel (%p255) target = $region32
      $region31: #{tpu_custom_call.1} parent=5 // pred_region
        %s259 = ssub.s32 %s23, 1
        %s260 = sand.u32 %s50, 1
        %s261 = scalar_lea.sflag [#allocation5], %s260
        %s262 = sand.u32 %s50, 1
        %s263 = smul.addr %s262, 8
        %s264 = scalar_lea.vmem [#allocation4], %s263
        // Predicated region
        $region33: #{tpu_custom_call.1} parent=31 // pred_check
          %p265 = pneg %p63
        $region34: #{tpu_custom_call.1} parent=31 // pred_check_branch
          %267 = sbr.rel (%p265) target = $region36
        $region35: #{tpu_custom_call.1} parent=31 // pred_region
          %268 = dma.done %s261, 128
        $region36: #{tpu_custom_call.1} parent=31 // pred_fallthru
          _
        %s269 = sand.u32 %s28, 1
        %s270 = scalar_lea.sflag [#allocation8], %s269
        %s271 = sand.u32 %s78, 1
        %s272 = smul.addr %s271, 8
        %s273 = scalar_lea.vmem [#allocation7], %s272
        // Predicated region
        $region37: #{tpu_custom_call.1} parent=31 // pred_check
          %p274 = pneg %p91
        $region38: #{tpu_custom_call.1} parent=31 // pred_check_branch
          %276 = sbr.rel (%p274) target = $region40
        $region39: #{tpu_custom_call.1} parent=31 // pred_region
          %277 = dma.done %s270, 128
        $region40: #{tpu_custom_call.1} parent=31 // pred_fallthru
          _
        %s278 = sand.u32 %s28, 1
        %s279 = scalar_lea.sflag [#allocation8], %s278
        %s280 = sand.u32 %s106, 1
        %s281 = smul.addr %s280, 2
        %s282 = scalar_lea.vmem [#allocation9], %s281
        // Predicated region
        $region41: #{tpu_custom_call.1} parent=31 // pred_check
          %p283 = pneg %p119
        $region42: #{tpu_custom_call.1} parent=31 // pred_check_branch
          %285 = sbr.rel (%p283) target = $region44
        $region43: #{tpu_custom_call.1} parent=31 // pred_region
          %286 = dma.done %s279, 32
        $region44: #{tpu_custom_call.1} parent=31 // pred_fallthru
          _
        %s287 = sand.u32 %s50, 1
        %s288 = scalar_lea.sflag [#allocation5], %s287
        %s289 = sand.u32 %s50, 1
        %s290 = smul.addr %s289, 8
        %s291 = scalar_lea.vmem [#allocation4], %s290
        %p292 = pneg %p63
        %p293 = pneg %p60
        %s294 = sand.u32 %s28, 1
        %s295 = scalar_lea.sflag [#allocation8], %s294
        %s296 = sand.u32 %s78, 1
        %s297 = smul.addr %s296, 8
        %s298 = scalar_lea.vmem [#allocation7], %s297
        %p299 = pneg %p91
        %p300 = pneg %p88
        %s301 = sand.u32 %s28, 1
        %s302 = scalar_lea.sflag [#allocation8], %s301
        %s303 = sand.u32 %s106, 1
        %s304 = smul.addr %s303, 2
        %s305 = scalar_lea.vmem [#allocation9], %s304
        %p306 = pneg %p119
        %p307 = pneg %p116
        %p308 = pneg %p145
        %p309 = pneg %p142
        %s310 = sand.u32 %s132, 1
        %s311 = scalar_lea.sflag [#allocation6], %s310
        %s312 = sand.u32 %s132, 1
        %s313 = smul.addr %s312, 2
        %s314 = scalar_lea.vmem [#allocation10], %s313
        %p315 = pneg %p171
        %p316 = pneg %p168
        %s317 = sand.u32 %s158, 1
        %s318 = scalar_lea.sflag [#allocation12], %s317
        %s319 = sand.u32 %s158, 1
        %s320 = smul.addr %s319, 2
        %s321 = scalar_lea.vmem [#allocation11], %s320
        %s322 = smul.u32 2, %s33
        %s323 = smul.u32 2, %s33
        %s324 = smul.u32 2, %s33
        %p325 = scmp.eq.s32.totalorder %s33, 0
        // Predicated region
        $region45: #{tpu_custom_call.1} parent=31 // pred_check
          %p326 = pneg %p325
        $region46: #{tpu_custom_call.1} parent=31 // pred_check_branch
          %328 = sbr.rel (%p326) target = $region48
        $region47: #{tpu_custom_call.1} parent=31 // pred_region
          %329 = vst [vmem:[#allocation2] sm:$0xff] 0.0
          %v330 = vlaneseq
          %vm331 = vcmp.ge.s32.totalorder %v330, 0
          %vm332 = vcmp.lt.s32.totalorder %v330, 256
          %vm333 = vmand %vm331, %vm332
          %334 = vst.msk [vmem:[#allocation3] sm:$0x3] %vm333, 0.0
        $region48: #{tpu_custom_call.1} parent=31 // pred_fallthru
          _
        %v335 = vld [vmem:[%s264] sm:$0xff]
        %v336 = vld [vmem:[%s273] sm:$0xff]
        %v337 = vsub.f32 %v335, %v336
        %v338 = vand.u32 2147483647, %v337
        %vm339 = vcmp.lt.f32.partialorder %v338, 1.0
        %v340 = vmul.f32 %v338, 0.5
        %v341 = vmul.f32 %v340, %v338
        %v342 = vsub.f32 %v338, 0.5
        %v343 = vsel %vm339, %v341, %v342
        %v344 = vld [vmem:[%s282] sm:$0x3]
        %vm345 = vcmp.gt.s32.totalorder %v344, 0
        %v346 = vld [vmem:[#allocation2] sm:$0xff]
        %v347 = vsel %vm345, 1, 0
        %v348 = vlaneseq
        %v349 = vshrl.u32 %v348, 7
        %v350 = vsub.s32 0, %v349
        %v351 = vrot.slane %v347, %v350
        %v352 = vlaneseq
        %v353 = vshrl.u32 %v352, 7
        %v354 = vsub.s32 1, %v353
        %v355 = vrot.slane %v347, %v354
        %vm356 = vcmp.eq.s32.totalorder %v351, 1
        %vm357 = vcmp.eq.s32.totalorder %v355, 1
        %v359 = vcombine.high %v343, %v343
        %v361 = vsel %vm356, %v343, 0.0
        %v362 = vsel %vm357, %v359, 0.0
        %v365 = vcombine.low %v361, %v362
        %v367 = vadd.f32 %v346, %v365
        %368 = vst [vmem:[#allocation2] sm:$0xff] %v367
        %v369 = vld [vmem:[#allocation3] sm:$0x3]
        %v370 = vcvt.s32.f32 %v347
        %v371 = vadd.f32 %v369, %v370
        %v372 = vlaneseq
        %vm373 = vcmp.ge.s32.totalorder %v372, 0
        %vm374 = vcmp.lt.s32.totalorder %v372, 256
        %vm375 = vmand %vm373, %vm374
        %376 = vst.msk [vmem:[#allocation3] sm:$0x3] %vm375, %v371
        // Predicated region
        $region49: #{tpu_custom_call.1} parent=31 // pred_check
          %p377 = pneg %p325
        $region50: #{tpu_custom_call.1} parent=31 // pred_check_branch
          %379 = sbr.rel (%p377) target = $region52
        $region51: #{tpu_custom_call.1} parent=31 // pred_region
          %v380 = vld [vmem:[#allocation2] sm:$0xff]
          %v382 = vcombine.high %v380, %v380
          %vm384 = vcmask 1043456
          %v385 = vsel %vm384, %v380, 0.0
          %v386 = vrot.slane %v385, 4
          %v387 = vadd.f32 %v385, %v386
          %v388 = vrot.slane %v387, 2
          %v389 = vadd.f32 %v387, %v388
          %v390 = vrot.slane %v389, 1
          %v391 = vadd.f32 %v389, %v390
          %v392 = vsel %vm384, %v382, 0.0
          %v393 = vrot.slane %v392, 4
          %v394 = vadd.f32 %v392, %v393
          %v395 = vrot.slane %v394, 2
          %v396 = vadd.f32 %v394, %v395
          %v397 = vrot.slane %v396, 1
          %v398 = vadd.f32 %v396, %v397
          %v401 = vcombine.low %v391, %v398
          %v403 = vunpack.c.l.s4 1966171168
          %v404 = vunpack.c.0.s8 %v403
          %v405 = vlaneseq
          %v406 = vshrl.u32 %v405, 7
          %v407 = vsub.s32 %v404, %v406
          %v408 = vrot.slane %v401, %v407
          %v410 = vunpack.c.l.s4 1966171168
          %v411 = vunpack.c.0.s8 %v410
          %v412 = vlaneseq
          %v413 = vshrl.u32 %v412, 7
          %v414 = vsub.s32 %v411, %v413
          %v415 = vrot.slane %v408, %v414
          %417 = vst.msk [vmem:[%s314] sm:$0x3] %vm375, %v415
          %v418 = vld [vmem:[#allocation3] sm:$0x3]
          %419 = vst.msk [vmem:[%s321] sm:$0x3] %vm375, %v418
        $region52: #{tpu_custom_call.1} parent=31 // pred_fallthru
          _
        %s420 = sand.u32 %s132, 1
        %s421 = scalar_lea.sflag [#allocation6], %s420
        %s422 = sand.u32 %s132, 1
        %s423 = smul.addr %s422, 2
        %s424 = scalar_lea.vmem [#allocation10], %s423
        %s425 = sand.u32 %s158, 1
        %s426 = scalar_lea.sflag [#allocation12], %s425
        %s427 = sand.u32 %s158, 1
        %s428 = smul.addr %s427, 2
        %s429 = scalar_lea.vmem [#allocation11], %s428
        // Predicated region
        $region53: #{tpu_custom_call.1} parent=31 // pred_check
          %p430 = pneg %p142
        $region54: #{tpu_custom_call.1} parent=31 // pred_check_branch
          %432 = sbr.rel (%p430) target = $region56
        $region55: #{tpu_custom_call.1} parent=31 // pred_region
          %s434 = ssub.s32 32, 32
          %435 = vsyncadd %s421, %s434
          %s436 = smul.addr %s32, 2
          %s437 = smul.addr %s436, 16
          %s438 = scalar_lea.hbm %s3, %s437
          %s440 = sshll.u32 %s424, 4
          %s441 = int_to_ptr.vmem [resolvable:$true] %s440
          %443 = dma.vmem_to_hbm [thread:$0]  %s441, 32, %s438, %s421
        $region56: #{tpu_custom_call.1} parent=31 // pred_fallthru
          _
        // Predicated region
        $region57: #{tpu_custom_call.1} parent=31 // pred_check
          %p444 = pneg %p168
        $region58: #{tpu_custom_call.1} parent=31 // pred_check_branch
          %446 = sbr.rel (%p444) target = $region60
        $region59: #{tpu_custom_call.1} parent=31 // pred_region
          %s448 = ssub.s32 32, 32
          %449 = vsyncadd %s426, %s448
          %s450 = smul.addr %s32, 2
          %s451 = smul.addr %s450, 16
          %s452 = scalar_lea.hbm %s4, %s451
          %s454 = sshll.u32 %s429, 4
          %s455 = int_to_ptr.vmem [resolvable:$true] %s454
          %457 = dma.vmem_to_hbm [thread:$0]  %s455, 32, %s452, %s426
        $region60: #{tpu_custom_call.1} parent=31 // pred_fallthru
          _
      $region32: #{tpu_custom_call.1} parent=5 // pred_fallthru
        _
      %p458 = scmp.le.s32.totalorder 2, %s23
      // Predicated region
      $region61: #{tpu_custom_call.1} parent=5 // pred_check
        %p459 = pneg %p458
      $region62: #{tpu_custom_call.1} parent=5 // pred_check_branch
        %461 = sbr.rel (%p459) target = $region64
      $region63: #{tpu_custom_call.1} parent=5 // pred_region
        %s462 = ssub.s32 %s23, 2
        // Predicated region
        $region65: #{tpu_custom_call.1} parent=63 // pred_check
          %p463 = pneg %p148
        $region66: #{tpu_custom_call.1} parent=63 // pred_check_branch
          %465 = sbr.rel (%p463) target = $region68
        $region67: #{tpu_custom_call.1} parent=63 // pred_region
          %s466 = sand.u32 %s133, 1
          %s467 = scalar_lea.sflag [#allocation6], %s466
          %s468 = sand.u32 %s133, 1
          %s469 = smul.addr %s468, 2
          %s470 = scalar_lea.vmem [#allocation10], %s469
          %471 = dma.done %s467, 32
        $region68: #{tpu_custom_call.1} parent=63 // pred_fallthru
          _
        // Predicated region
        $region69: #{tpu_custom_call.1} parent=63 // pred_check
          %p472 = pneg %p174
        $region70: #{tpu_custom_call.1} parent=63 // pred_check_branch
          %474 = sbr.rel (%p472) target = $region72
        $region71: #{tpu_custom_call.1} parent=63 // pred_region
          %s475 = sand.u32 %s159, 1
          %s476 = scalar_lea.sflag [#allocation12], %s475
          %s477 = sand.u32 %s159, 1
          %s478 = smul.addr %s477, 2
          %s479 = scalar_lea.vmem [#allocation11], %s478
          %480 = dma.done %s476, 32
        $region72: #{tpu_custom_call.1} parent=63 // pred_fallthru
          _
      $region64: #{tpu_custom_call.1} parent=5 // pred_fallthru
        _
    $region6: #{tpu_custom_call.1} parent=1 // loop_footer
      %s27 = sadd.s32 1, %s23
    $region7: #{tpu_custom_call.1} parent=1 // loop_footer_branch
      %22 = sbr.rel target = $region3
    $region8: #{tpu_custom_call.1} parent=1 // loop_exit
      _
    %481 = vsyncpa [#allocation5], 1
    %s482 = scalar_lea.sflag [#allocation5], 1
    %483 = vsyncpa %s482, 1
    %484 = vsyncpa [#allocation8], 1
    %s485 = scalar_lea.sflag [#allocation8], 1
    %486 = vsyncpa %s485, 1
    %487 = vsyncpa [#allocation6], 1
    %s488 = scalar_lea.sflag [#allocation6], 1
    %489 = vsyncpa %s488, 1
    %490 = vsyncpa [#allocation12], 1
    %s491 = scalar_lea.sflag [#allocation12], 1
    %492 = vsyncpa %s491, 1

</llo_original>
